<compile_context>
chip_gen: v6e
topology: v6e:2x2x1
jax: 0.10.0
libtpu: 0.0.40
codegen_flags: <defaults>
</compile_context>

<pallas_src>
import jax
import jax.numpy as jnp
from jax.experimental import pallas as pl
from jax.experimental.pallas import tpu as pltpu


def _conv_bn_relu6_kernel(x_ref, w_ref, b_ref, o_ref):
    # x_ref: (C_in, T) input tile, w_ref: (C_out, C_in) BN-scale-folded weight,
    # b_ref: (C_out, 1) folded BN bias (f32), o_ref: (C_out, T) output tile.
    # MXU matmul with f32 accumulation; bias add + ReLU6 clamp in f32.
    y = jnp.dot(w_ref[...], x_ref[...], preferred_element_type=jnp.float32)
    y = jnp.clip(y + b_ref[...], 0.0, 6.0)
    o_ref[...] = y.astype(o_ref.dtype)


def fold_conv_bn_params(weight, gamma, beta, running_mean, running_var,
                        eps=1e-5, compute_dtype=jnp.bfloat16):
    """Fold eval-mode BatchNorm into the 1x1-conv weight and a bias vector.

    Weights/BN stats are static at inference, so this can (and should) be
    precomputed once; the per-call path is then just the pallas_call.
    """
    C_out, C_in = weight.shape[0], weight.shape[1]
    inv_std = 1.0 / jnp.sqrt(running_var.astype(jnp.float32) + eps)
    scale = gamma.astype(jnp.float32) * inv_std                       # (C_out,)
    w_mat = (weight.reshape(C_out, C_in).astype(jnp.float32)
             * scale[:, None]).astype(compute_dtype)                  # (C_out, C_in)
    bias = (beta.astype(jnp.float32)
            - running_mean.astype(jnp.float32) * scale).reshape(C_out, 1)
    return w_mat, bias


def conv2d_bn_relu6(x_nchw, weight, gamma, beta, running_mean, running_var,
                    eps=1e-5, tile_hw=None, compute_dtype=jnp.bfloat16,
                    out_dtype=None):
    """x_nchw: (N, C_in, H, W); weight: (C_out, C_in, 1, 1). Returns NCHW."""
    N, C_in, H, W = x_nchw.shape
    C_out = weight.shape[0]
    HW = H * W
    if out_dtype is None:
        out_dtype = x_nchw.dtype

    # NCHW-native: flatten spatial only (free reshape, no transpose) and cast
    # to the compute dtype (bf16 by default -> MXU-native, halves input reads).
    x = x_nchw.reshape(N, C_in, HW).astype(compute_dtype)

    # TODO(synk): training-mode BN (batch statistics) not reproduced; this uses
    # running stats as in inference/eval mode.
    w_mat, bias = fold_conv_bn_params(weight, gamma, beta, running_mean,
                                      running_var, eps, compute_dtype)

    # --- Spatial tile selection -------------------------------------------
    in_b = jnp.dtype(compute_dtype).itemsize
    out_b = jnp.dtype(out_dtype).itemsize
    if tile_hw is None:
        # Largest 128-aligned tile whose double-buffered in+out footprint stays
        # under ~24 MiB (fits the 32 MiB scoped VMEM we request on every gen).
        budget = 24 * 1024 * 1024
        max_tile = budget // (2 * (C_in * in_b + C_out * out_b))
        max_tile = min(16384, max(128, (max_tile // 128) * 128))
        tile_hw = HW if HW <= max_tile else max_tile
    if tile_hw != HW and tile_hw % 128 != 0:
        # Keep the output last dim lane-dense (multiple of 128) when tiling.
        tile_hw = min(HW, pl.cdiv(tile_hw, 128) * 128)
    n_hw = pl.cdiv(HW, tile_hw)

    # v7x megacore: guarantee >= 2 grid steps so both TensorCores get work.
    if N * n_hw < 2 and HW > 128:
        tile_hw = pl.cdiv(pl.cdiv(HW, 2), 128) * 128
        n_hw = pl.cdiv(HW, tile_hw)

    out = pl.pallas_call(
        _conv_bn_relu6_kernel,
        out_shape=jax.ShapeDtypeStruct((N, C_out, HW), out_dtype),
        grid=(N, n_hw),
        in_specs=[
            pl.BlockSpec((pl.Squeezed(), C_in, tile_hw),
                         lambda n, j: (n, 0, j)),
            pl.BlockSpec((C_out, C_in), lambda n, j: (0, 0)),
            pl.BlockSpec((C_out, 1), lambda n, j: (0, 0)),
        ],
        out_specs=pl.BlockSpec((pl.Squeezed(), C_out, tile_hw),
                               lambda n, j: (n, 0, j)),
        compiler_params=pltpu.CompilerParams(
            dimension_semantics=("parallel", "parallel"),
            vmem_limit_bytes=32 * 1024 * 1024),
    )(x, w_mat, bias)

    # (N, C_out, H*W) -> (N, C_out, H, W): free reshape, still NCHW.
    return out.reshape(N, C_out, H, W)


def reference(x_nchw, weight, gamma, beta, running_mean, running_var, eps=1e-5):
    # Plain-JAX (f32) reference for sanity checking.
    C_out, C_in = weight.shape[0], weight.shape[1]
    w_mat = weight.reshape(C_out, C_in)
    y = jnp.einsum('nchw,oc->nohw', x_nchw, w_mat)
    inv_std = 1.0 / jnp.sqrt(running_var + eps)
    scale = (gamma * inv_std).reshape(1, C_out, 1, 1)
    bias = (beta - running_mean * gamma * inv_std).reshape(1, C_out, 1, 1)
    return jnp.clip(y * scale + bias, 0.0, 6.0)


if __name__ == "__main__":
    key = jax.random.PRNGKey(0)
    k_x, k_w, k_g, k_b, k_m, k_v = jax.random.split(key, 6)

    # Small shapes consistent with the module (C_in=24, C_out=144).
    N, C_in, H, W = 2, 24, 16, 16
    C_out = 144

    x = jax.random.normal(k_x, (N, C_in, H, W), dtype=jnp.float32)
    weight = jax.random.normal(k_w, (C_out, C_in, 1, 1), dtype=jnp.float32) * 0.1
    gamma = jax.random.normal(k_g, (C_out,), dtype=jnp.float32) * 0.1 + 1.0
    beta = jax.random.normal(k_b, (C_out,), dtype=jnp.float32) * 0.1
    running_mean = jax.random.normal(k_m, (C_out,), dtype=jnp.float32) * 0.1
    running_var = jax.random.uniform(k_v, (C_out,), dtype=jnp.float32,
                                     minval=0.5, maxval=1.5)

    ref = reference(x, weight, gamma, beta, running_mean, running_var)

    # Default path: bf16 operands on the MXU, f32 accumulate, f32 output.
    out = conv2d_bn_relu6(x, weight, gamma, beta, running_mean, running_var)
    out = jax.block_until_ready(out)
    assert out.shape == (N, C_out, H, W), out.shape
    # bf16 operand rounding => loose tolerance vs the f32 reference.
    assert jnp.allclose(out, ref, atol=5e-2, rtol=5e-2), "bf16-path mismatch"

    # f32 compute path for a tight numerical check of the fused kernel.
    out_f32 = conv2d_bn_relu6(x, weight, gamma, beta, running_mean,
                              running_var, compute_dtype=jnp.float32)
    out_f32 = jax.block_until_ready(out_f32)
    assert jnp.allclose(out_f32, ref, atol=1e-4, rtol=1e-4), "f32-path mismatch"

    print("KERNEL_OK")
</pallas_src>

<mosaic_0001>
module attributes {stable_mosaic.version = 11 : i64} {
  func.func @_conv_bn_relu6_kernel(%arg0: i32, %arg1: i32, %arg2: memref<1x24x256xbf16, #tpu.memory_space<vmem>>, %arg3: memref<144x24xbf16, #tpu.memory_space<vmem>>, %arg4: memref<144x1xf32, #tpu.memory_space<vmem>>, %arg5: memref<1x144x256xf32, #tpu.memory_space<vmem>>) attributes {dimension_semantics = [#tpu.dimension_semantics<parallel>, #tpu.dimension_semantics<parallel>], iteration_bounds = array<i64: 2, 1>, scalar_prefetch = 0 : i64, scratch_operands = 0 : i64, tpu.core_type = #tpu.core_type<tc>, window_params = [{transform_indices = @transform_0, window_bounds = array<i64: 1, 24, 256>}, {pipeline_mode = #tpu.pipeline_mode<synchronous>, transform_indices = @transform_1, window_bounds = array<i64: 144, 24>}, {pipeline_mode = #tpu.pipeline_mode<synchronous>, transform_indices = @transform_2, window_bounds = array<i64: 144, 1>}, {transform_indices = @transform_3, window_bounds = array<i64: 1, 144, 256>}]} {
    %c0 = arith.constant 0 : index
    %c0_0 = arith.constant 0 : index
    %0 = vector.load %arg3[%c0, %c0_0] : memref<144x24xbf16, #tpu.memory_space<vmem>>, vector<144x24xbf16>
    %c0_1 = arith.constant 0 : index
    %c0_2 = arith.constant 0 : index
    %c0_3 = arith.constant 0 : index
    %1 = vector.load %arg2[%c0_1, %c0_2, %c0_3] : memref<1x24x256xbf16, #tpu.memory_space<vmem>>, vector<1x24x256xbf16>
    %2 = vector.shape_cast %1 : vector<1x24x256xbf16> to vector<24x256xbf16>
    %cst = arith.constant dense<0.000000e+00> : vector<144x256xf32>
    %3 = tpu.matmul %0, %2, %cst {dimension_numbers = #tpu.dot_dimension_numbers<[1], [0], [0], [1], [0, 0, 1, 1], [], []>} : vector<144x24xbf16>, vector<24x256xbf16>, vector<144x256xf32> -> vector<144x256xf32>
    %c0_4 = arith.constant 0 : index
    %c0_5 = arith.constant 0 : index
    %4 = vector.load %arg4[%c0_4, %c0_5] : memref<144x1xf32, #tpu.memory_space<vmem>>, vector<144x1xf32>
    %5 = vector.broadcast %4 : vector<144x1xf32> to vector<144x256xf32>
    %6 = arith.addf %3, %5 : vector<144x256xf32>
    %cst_6 = arith.constant 0.000000e+00 : f32
    %cst_7 = arith.constant 6.000000e+00 : f32
    %7 = vector.broadcast %cst_6 : f32 to vector<144x256xf32>
    %8 = arith.maximumf %7, %6 : vector<144x256xf32>
    %9 = vector.broadcast %cst_7 : f32 to vector<144x256xf32>
    %10 = arith.minimumf %9, %8 : vector<144x256xf32>
    %c0_8 = arith.constant 0 : index
    %c0_9 = arith.constant 0 : index
    %c0_10 = arith.constant 0 : index
    %11 = vector.load %arg5[%c0_8, %c0_9, %c0_10] : memref<1x144x256xf32, #tpu.memory_space<vmem>>, vector<1x144x256xf32>
    %12 = vector.shape_cast %11 : vector<1x144x256xf32> to vector<144x256xf32>
    %13 = vector.shape_cast %10 : vector<144x256xf32> to vector<1x144x256xf32>
    tpu.vector_store %arg5[%c0_8, %c0_9, %c0_10], %13 {strides = array<i32>} : memref<1x144x256xf32, #tpu.memory_space<vmem>>, vector<1x144x256xf32>,
    return
  }
  func.func @transform_0(%arg0: i32, %arg1: i32) -> (i32, i32, i32) {
    %c0_i32 = arith.constant 0 : i32
    %c0_i32_0 = arith.constant 0 : i32
    return %arg0, %c0_i32, %arg1 : i32, i32, i32
  }
  func.func @transform_1(%arg0: i32, %arg1: i32) -> (i32, i32) {
    %c0_i32 = arith.constant 0 : i32
    %c0_i32_0 = arith.constant 0 : i32
    %c0_i32_1 = arith.constant 0 : i32
    return %c0_i32, %c0_i32_0 : i32, i32
  }
  func.func @transform_2(%arg0: i32, %arg1: i32) -> (i32, i32) {
    %c0_i32 = arith.constant 0 : i32
    %c0_i32_0 = arith.constant 0 : i32
    %c0_i32_1 = arith.constant 0 : i32
    return %c0_i32, %c0_i32_0 : i32, i32
  }
  func.func @transform_3(%arg0: i32, %arg1: i32) -> (i32, i32, i32) {
    %c0_i32 = arith.constant 0 : i32
    %c0_i32_0 = arith.constant 0 : i32
    return %arg0, %c0_i32, %arg1 : i32, i32, i32
  }
}

</mosaic_0001>

<llo_original>
// kernel: tpu_custom_call.1
$region0: #{tpu_custom_call.1}
  #allocation0 [shape = 'u32[]', space=smem, size = 0x4, offset = 0x4, fixed_abs, tag = 'smem constant byte address 0x4 - core index']
  #allocation1 [shape = 'u32[144,128]{1,0:T(1,128)}', space=vmem, size = 0x12000, scoped, tag = 'internal scratch']
  %s0 = inlined_call_operand.vmem [shape: bf16[2,24,256], index: 0, kind: input, shape index: {}]
  %s1 = inlined_call_operand.vmem [shape: bf16[144,24], index: 1, kind: input, shape index: {}]
  %s2 = inlined_call_operand.vmem [shape: f32[144,1], index: 2, kind: input, shape index: {}]
  %s3 = inlined_call_operand.hbm [shape: f32[2,144,256], index: 3, kind: output, shape index: {}]
  %s4 = sld [smem:[#allocation0]]
  $region45: #{tpu_custom_call.1} parent=0
    _
  %s6 = ssub.s32 1, %s4
  %s7 = scalar_select 0, %s6, %s4
  $region1: #{tpu_custom_call.1} parent=0
    #allocation2 [shape = 'u8[294912]{0}', space=vmem, size = 0x48000, scoped, tag = 'output window, operand 0']
    #allocation3 [shape = 's32[2]{0}', space=sflag, size = 0x8, scoped, tag = 'scoped memory for tpu_custom_call.1']
    %8 = vsyncpa [#allocation3], 0
    %s9 = scalar_lea.sflag [#allocation3], 1
    %10 = vsyncpa %s9, 0
    loop: start=0, step=1, limit=4
    $region2: #{tpu_custom_call.1} parent=1 // loop_pre_header
      _
    $region3: #{tpu_custom_call.1} parent=1 // loop_header
      %s12 = sphi 0, %s16
      %p13 = scmp.ge.s32.totalorder %s12, 4
      %s19 = sphi 0, %s31
      %s20 = sphi 0, %s27
      %s21 = sphi 0, %s19
      %s22 = sphi 0, %s20
      %s23 = sphi 0, %s21
      %s24 = sphi 0, %s22
      %s36 = sphi 0, %s38
      %s39 = sphi 0, %s36
      %s40 = sphi 0, %s39
      %s56 = sphi 0, %s40
      %s60 = sphi 0, %s60
      %s62 = sphi 0, %s60
      %s63 = sphi 0, %s62
      %s77 = sphi 0, %s63
      %s81 = sphi 0, %s81
      %s83 = sphi 0, %s81
      %s84 = sphi 0, %s83
      %s98 = sphi 0, %s84
      %s106 = sphi 0, %s108
      %s109 = sphi 0, %s106
      %s110 = sphi 0, %s109
      %s126 = sphi 0, %s110
    $region4: #{tpu_custom_call.1} parent=1 // loop_header_branch
      %15 = sbr.rel (%p13) target = $region8
    $region5: #{tpu_custom_call.1} parent=1 // loop_body
      %s17 = ssub.s32 %s12, 1
      %s18 = ssub.s32 %s12, 2
      %s25 = sadd.s32 1, %s20
      %p26 = scmp.ge.s32.totalorder %s25, 1
      %s27 = scalar_select %p26, 0, %s25
      %s28 = sadd.s32 1, %s19
      %s29 = scalar_select %p26, %s28, %s19
      %p30 = scmp.ge.s32.totalorder %s29, 2
      %s31 = scalar_select %p30, 0, %s29
      %s32 = ssub.s32 %s19, %s31
      %s33 = ssub.s32 %s20, %s27
      %s34 = sor.u32 %s32, %s33
      %p35 = scmp.eq.s32.totalorder %s34, 0
      %s37 = sadd.s32 %s36, 1
      %s38 = scalar_select %p35, %s36, %s37
      %p41 = pneg %p35
      %p42 = scmp.eq.s32.totalorder %s12, 1
      %p43 = por %p41, %p42
      %p44 = scmp.ne.s32.totalorder %s36, %s39
      %p45 = scmp.eq.s32.totalorder %s12, 0
      %p46 = por %p44, %p45
      %p47 = scmp.ne.s32.totalorder %s36, %s39
      %p48 = scmp.eq.s32.totalorder %s17, 1
      %p49 = por %p47, %p48
      %p50 = scmp.ne.s32.totalorder %s39, %s40
      %p51 = scmp.eq.s32.totalorder %s17, 0
      %p52 = por %p50, %p51
      %p53 = scmp.ne.s32.totalorder %s39, %s40
      %p54 = scmp.eq.s32.totalorder %s18, 1
      %p55 = por %p53, %p54
      %p57 = scmp.ne.s32.totalorder %s40, %s56
      %p58 = scmp.eq.s32.totalorder %s18, 0
      %p59 = por %p57, %p58
      %s61 = sadd.s32 %s60, 1
      %p64 = scmp.eq.s32.totalorder %s12, 1
      %p65 = scmp.ne.s32.totalorder %s60, %s62
      %p66 = scmp.eq.s32.totalorder %s12, 0
      %p67 = por %p65, %p66
      %p68 = scmp.ne.s32.totalorder %s60, %s62
      %p69 = scmp.eq.s32.totalorder %s17, 1
      %p70 = por %p68, %p69
      %p71 = scmp.ne.s32.totalorder %s62, %s63
      %p72 = scmp.eq.s32.totalorder %s17, 0
      %p73 = por %p71, %p72
      %p74 = scmp.ne.s32.totalorder %s62, %s63
      %p75 = scmp.eq.s32.totalorder %s18, 1
      %p76 = por %p74, %p75
      %p78 = scmp.ne.s32.totalorder %s63, %s77
      %p79 = scmp.eq.s32.totalorder %s18, 0
      %p80 = por %p78, %p79
      %s82 = sadd.s32 %s81, 1
      %p85 = scmp.eq.s32.totalorder %s12, 1
      %p86 = scmp.ne.s32.totalorder %s81, %s83
      %p87 = scmp.eq.s32.totalorder %s12, 0
      %p88 = por %p86, %p87
      %p89 = scmp.ne.s32.totalorder %s81, %s83
      %p90 = scmp.eq.s32.totalorder %s17, 1
      %p91 = por %p89, %p90
      %p92 = scmp.ne.s32.totalorder %s83, %s84
      %p93 = scmp.eq.s32.totalorder %s17, 0
      %p94 = por %p92, %p93
      %p95 = scmp.ne.s32.totalorder %s83, %s84
      %p96 = scmp.eq.s32.totalorder %s18, 1
      %p97 = por %p95, %p96
      %p99 = scmp.ne.s32.totalorder %s84, %s98
      %p100 = scmp.eq.s32.totalorder %s18, 0
      %p101 = por %p99, %p100
      %s102 = ssub.s32 %s19, %s31
      %s103 = ssub.s32 %s20, %s27
      %s104 = sor.u32 %s102, %s103
      %p105 = scmp.eq.s32.totalorder %s104, 0
      %s107 = sadd.s32 %s106, 1
      %s108 = scalar_select %p105, %s106, %s107
      %p111 = pneg %p105
      %p112 = scmp.eq.s32.totalorder %s12, 1
      %p113 = por %p111, %p112
      %p114 = scmp.ne.s32.totalorder %s106, %s109
      %p115 = scmp.eq.s32.totalorder %s12, 0
      %p116 = por %p114, %p115
      %p117 = scmp.ne.s32.totalorder %s106, %s109
      %p118 = scmp.eq.s32.totalorder %s17, 1
      %p119 = por %p117, %p118
      %p120 = scmp.ne.s32.totalorder %s109, %s110
      %p121 = scmp.eq.s32.totalorder %s17, 0
      %p122 = por %p120, %p121
      %p123 = scmp.ne.s32.totalorder %s109, %s110
      %p124 = scmp.eq.s32.totalorder %s18, 1
      %p125 = por %p123, %p124
      %p127 = scmp.ne.s32.totalorder %s110, %s126
      %p128 = scmp.eq.s32.totalorder %s18, 0
      %p129 = por %p127, %p128
      %p130 = scmp.le.s32.totalorder 1, %s12
      %p131 = scmp.lt.s32.totalorder %s12, 3
      %p132 = pnand %p130, %p131
      %p133 = pneg %p132
      // Predicated region
      $region9: #{tpu_custom_call.1} parent=5 // pred_check
        _
      $region10: #{tpu_custom_call.1} parent=5 // pred_check_branch
        %135 = sbr.rel (%p132) target = $region12
      $region11: #{tpu_custom_call.1} parent=5 // pred_region
        %s136 = ssub.s32 %s12, 1
        // Predicated region
        $region13: #{tpu_custom_call.1} parent=11 // pred_check
          %p137 = pneg %p73
        $region14: #{tpu_custom_call.1} parent=11 // pred_check_branch
          %139 = sbr.rel (%p137) target = $region16
        $region15: #{tpu_custom_call.1} parent=11 // pred_region
          _
        $region16: #{tpu_custom_call.1} parent=11 // pred_fallthru
          _
        // Predicated region
        $region17: #{tpu_custom_call.1} parent=11 // pred_check
          %p140 = pneg %p94
        $region18: #{tpu_custom_call.1} parent=11 // pred_check_branch
          %142 = sbr.rel (%p140) target = $region20
        $region19: #{tpu_custom_call.1} parent=11 // pred_region
          _
        $region20: #{tpu_custom_call.1} parent=11 // pred_fallthru
          _
      $region12: #{tpu_custom_call.1} parent=5 // pred_fallthru
        _
      %p143 = scmp.lt.s32.totalorder %s12, 2
      // Predicated region
      $region21: #{tpu_custom_call.1} parent=5 // pred_check
        %p144 = pneg %p143
      $region22: #{tpu_custom_call.1} parent=5 // pred_check_branch
        %146 = sbr.rel (%p144) target = $region24
      $region23: #{tpu_custom_call.1} parent=5 // pred_region
        // Predicated region
        $region25: #{tpu_custom_call.1} parent=23 // pred_check
          %p147 = pneg %p46
        $region26: #{tpu_custom_call.1} parent=23 // pred_check_branch
          %149 = sbr.rel (%p147) target = $region28
        $region27: #{tpu_custom_call.1} parent=23 // pred_region
          %s150 = smul.u32 2, %s20
          %p151 = scmp.lt.s32.totalorder %s19, 1
          %s152 = scalar_select %p151, %s19, 1
          %p153 = scmp.lt.s32.totalorder %s150, 1
          %s154 = scalar_select %p153, %s150, 1
          %s155 = smul.addr %s152, 6
          %s156 = sadd.s32 %s154, %s155
          %s157 = smul.addr %s156, 4
          %s158 = scalar_lea.vmem %s0, %s157
          %s159 = smul.u32 2, %s20
        $region28: #{tpu_custom_call.1} parent=23 // pred_fallthru
          _
      $region24: #{tpu_custom_call.1} parent=5 // pred_fallthru
        _
      %p160 = scmp.le.s32.totalorder 1, %s12
      %p161 = scmp.lt.s32.totalorder %s12, 3
      %p162 = pnand %p160, %p161
      %p163 = pneg %p162
      // Predicated region
      $region29: #{tpu_custom_call.1} parent=5 // pred_check
        _
      $region30: #{tpu_custom_call.1} parent=5 // pred_check_branch
        %165 = sbr.rel (%p162) target = $region32
      $region31: #{tpu_custom_call.1} parent=5 // pred_region
        %s166 = ssub.s32 %s12, 1
        %s167 = smul.u32 2, %s22
        %p168 = scmp.lt.s32.totalorder %s21, 1
        %s169 = scalar_select %p168, %s21, 1
        %p170 = scmp.lt.s32.totalorder %s167, 1
        %s171 = scalar_select %p170, %s167, 1
        %s172 = smul.addr %s169, 6
        %s173 = sadd.s32 %s171, %s172
        %s174 = smul.addr %s173, 4
        %s175 = scalar_lea.vmem %s0, %s174
        %p176 = pneg %p52
        %p177 = pneg %p49
        %p178 = pneg %p73
        %p179 = pneg %p70
        %p180 = pneg %p94
        %p181 = pneg %p91
        %p182 = pneg %p122
        %p183 = pneg %p119
        %s184 = sand.u32 %s109, 1
        %s185 = scalar_lea.sflag [#allocation3], %s184
        %s186 = sand.u32 %s109, 1
        %s187 = smul.addr %s186, 288
        %s188 = scalar_lea.vmem [#allocation2], %s187
        %s189 = smul.u32 2, %s22
        %p190 = scmp.lt.s32.totalorder %s21, 1
        %s191 = scalar_select %p190, %s21, 1
        %p192 = scmp.lt.s32.totalorder %s189, 1
        %s193 = scalar_select %p192, %s189, 1
        %s194 = smul.addr %s191, 6
        %s195 = sadd.s32 %s193, %s194
        %s196 = smul.addr %s195, 4
        %s197 = scalar_lea.vmem %s0, %s196
        %s198 = smul.u32 2, %s22
        %s199 = smul.u32 2, %s22
        %v201 = vld [vmem:[%s1] sm:$0xf]
        %v202 = vld [vmem:[%s1 + $0x4] sm:$0xf]
        %v203 = vld [vmem:[%s1 + $0x8] sm:$0xf]
        %v204 = vld [vmem:[%s1 + $0xc] sm:$0xf]
        %v205 = vld [vmem:[%s1 + $0x10] sm:$0xf]
        %v206 = vld [vmem:[%s1 + $0x14] sm:$0xf]
        %v207 = vld [vmem:[%s1 + $0x18] sm:$0xf]
        %v208 = vld [vmem:[%s1 + $0x1c] sm:$0xf]
        %v209 = vld [vmem:[%s1 + $0x20] sm:$0xf]
        %v210 = vld [vmem:[%s1 + $0x24] sm:$0xf]
        %v211 = vld [vmem:[%s1 + $0x28] sm:$0xf]
        %v212 = vld [vmem:[%s1 + $0x2c] sm:$0xf]
        %v213 = vld [vmem:[%s1 + $0x30] sm:$0xf]
        %v214 = vld [vmem:[%s1 + $0x34] sm:$0xf]
        %v215 = vld [vmem:[%s1 + $0x38] sm:$0xf]
        %v216 = vld [vmem:[%s1 + $0x3c] sm:$0xf]
        %v217 = vld [vmem:[%s1 + $0x40] sm:$0xf]
        %v218 = vld [vmem:[%s1 + $0x44] sm:$0xf]
        %v219 = vld [vmem:[%s197] sm:$0xff]
        %v220 = vld [vmem:[%s197 + $0x8] sm:$0xff]
        %v221 = vld [vmem:[%s197 + $0x10] sm:$0xff]
        %v222 = vld [vmem:[%s2] sm:$0xff]
        %v223 = vld [vmem:[%s2 + $0x8] sm:$0xff]
        %v224 = vld [vmem:[%s2 + $0x10] sm:$0xff]
        %v225 = vld [vmem:[%s2 + $0x18] sm:$0xff]
        %v226 = vld [vmem:[%s2 + $0x20] sm:$0xff]
        %v227 = vld [vmem:[%s2 + $0x28] sm:$0xff]
        %v228 = vld [vmem:[%s2 + $0x30] sm:$0xff]
        %v229 = vld [vmem:[%s2 + $0x38] sm:$0xff]
        %v230 = vld [vmem:[%s2 + $0x40] sm:$0xff]
        %v231 = vld [vmem:[%s2 + $0x48] sm:$0xff]
        %v232 = vld [vmem:[%s2 + $0x50] sm:$0xff]
        %v233 = vld [vmem:[%s2 + $0x58] sm:$0xff]
        %v234 = vld [vmem:[%s2 + $0x60] sm:$0xff]
        %v235 = vld [vmem:[%s2 + $0x68] sm:$0xff]
        %v236 = vld [vmem:[%s2 + $0x70] sm:$0xff]
        %v237 = vld [vmem:[%s2 + $0x78] sm:$0xff]
        %v238 = vld [vmem:[%s2 + $0x80] sm:$0xff]
        %v239 = vld [vmem:[%s2 + $0x88] sm:$0xff]
        %241 = vset.pattern.permute.xlu0 0
        %242 = vperm.xlu0 %241, %v222
        %v243 = vpop.permute.xlu0 %242
        %246 = vset.pattern.permute.xlu0 0
        %247 = vperm.xlu0 %246, %v223
        %v248 = vpop.permute.xlu0 %247
        %251 = vset.pattern.permute.xlu0 0
        %252 = vperm.xlu0 %251, %v224
        %v253 = vpop.permute.xlu0 %252
        %256 = vset.pattern.permute.xlu0 0
        %257 = vperm.xlu0 %256, %v225
        %v258 = vpop.permute.xlu0 %257
        %261 = vset.pattern.permute.xlu0 0
        %262 = vperm.xlu0 %261, %v226
        %v263 = vpop.permute.xlu0 %262
        %266 = vset.pattern.permute.xlu0 0
        %267 = vperm.xlu0 %266, %v227
        %v268 = vpop.permute.xlu0 %267
        %271 = vset.pattern.permute.xlu0 0
        %272 = vperm.xlu0 %271, %v228
        %v273 = vpop.permute.xlu0 %272
        %276 = vset.pattern.permute.xlu0 0
        %277 = vperm.xlu0 %276, %v229
        %v278 = vpop.permute.xlu0 %277
        %281 = vset.pattern.permute.xlu0 0
        %282 = vperm.xlu0 %281, %v230
        %v283 = vpop.permute.xlu0 %282
        %286 = vset.pattern.permute.xlu0 0
        %287 = vperm.xlu0 %286, %v231
        %v288 = vpop.permute.xlu0 %287
        %291 = vset.pattern.permute.xlu0 0
        %292 = vperm.xlu0 %291, %v232
        %v293 = vpop.permute.xlu0 %292
        %296 = vset.pattern.permute.xlu0 0
        %297 = vperm.xlu0 %296, %v233
        %v298 = vpop.permute.xlu0 %297
        %301 = vset.pattern.permute.xlu0 0
        %302 = vperm.xlu0 %301, %v234
        %v303 = vpop.permute.xlu0 %302
        %306 = vset.pattern.permute.xlu0 0
        %307 = vperm.xlu0 %306, %v235
        %v308 = vpop.permute.xlu0 %307
        %311 = vset.pattern.permute.xlu0 0
        %312 = vperm.xlu0 %311, %v236
        %v313 = vpop.permute.xlu0 %312
        %316 = vset.pattern.permute.xlu0 0
        %317 = vperm.xlu0 %316, %v237
        %v318 = vpop.permute.xlu0 %317
        %321 = vset.pattern.permute.xlu0 0
        %322 = vperm.xlu0 %321, %v238
        %v323 = vpop.permute.xlu0 %322
        %326 = vset.pattern.permute.xlu0 0
        %327 = vperm.xlu0 %326, %v239
        %v328 = vpop.permute.xlu0 %327
        %v348 = vunpack.c.l.b16 %v201
        %v349 = vunpack.c.l.b16 %v202
        %v350 = vunpack.c.l.b16 %v203
        %v351 = vunpack.c.l.b16 %v204
        %v352 = vunpack.c.l.b16 %v205
        %v353 = vunpack.c.l.b16 %v206
        %v354 = vunpack.c.l.b16 %v207
        %v355 = vunpack.c.l.b16 %v208
        %v356 = vunpack.c.l.b16 %v209
        %v357 = vunpack.c.l.b16 %v210
        %v358 = vunpack.c.l.b16 %v211
        %v359 = vunpack.c.l.b16 %v212
        %v360 = vunpack.c.l.b16 %v213
        %v361 = vunpack.c.l.b16 %v214
        %v362 = vunpack.c.l.b16 %v215
        %v363 = vunpack.c.l.b16 %v216
        %v364 = vunpack.c.l.b16 %v217
        %v365 = vunpack.c.l.b16 %v218
        %v366 = vpack.c.b16 %v349, %v348
        %v367 = vpack.c.b16 %v351, %v350
        %v368 = vpack.c.b16 %v353, %v352
        %v369 = vpack.c.b16 %v355, %v354
        %v370 = vpack.c.b16 %v357, %v356
        %v371 = vpack.c.b16 %v359, %v358
        %v372 = vpack.c.b16 %v361, %v360
        %v373 = vpack.c.b16 %v363, %v362
        %v374 = vpack.c.b16 %v365, %v364
        %v378 = vunpack.c.l.b16 %v219
        %v379 = vunpack.c.h.b16 %v219
        %v380 = vunpack.c.l.b16 %v220
        %v381 = vunpack.c.h.b16 %v220
        %v382 = vunpack.c.l.b16 %v221
        %v383 = vunpack.c.h.b16 %v221
        %v384 = vpack.c.b16 %v380, %v378
        %v385 = vpack.c.b16 %v381, %v379
        %v386 = vpack.c.b16 %v382, %v382
        %v387 = vpack.c.b16 %v383, %v383
        %vm390 = vcmask 195584
        %v392 = vsel %vm390, %v366, 0
        %v395 = vsel %vm390, %v367, 0
        %v398 = vsel %vm390, %v368, 0
        %v401 = vsel %vm390, %v369, 0
        %v404 = vsel %vm390, %v370, 0
        %v407 = vsel %vm390, %v371, 0
        %v410 = vsel %vm390, %v372, 0
        %v413 = vsel %vm390, %v373, 0
        %v416 = vsel %vm390, %v374, 0
        %vm418 = vcmask 1043456
        %v420 = vsel %vm418, %v386, 0
        %v423 = vsel %vm418, %v387, 0
        %425 = vmatprep.subr.bf16.mxu0 0
        %426 = vmatpush1.bf16.msra.mxu0 0
        %427 = vmatprep.subr.bf16.mxu0 0
        %428 = vmatpush1.bf16.msra.mxu0 0
        %429 = vmatprep.subr.bf16.mxu0 0
        %430 = vmatpush1.bf16.msra.mxu0 0
        %431 = vmatprep.subr.bf16.mxu0 0
        %432 = vmatpush1.bf16.msra.mxu0 0
        %433 = vmatprep.subr.bf16.mxu0 0
        %434 = vmatpush1.bf16.msra.mxu0 0
        %435 = vmatprep.subr.bf16.mxu0 0
        %436 = vmatpush1.bf16.msra.mxu0 0
        %437 = vmatprep.subr.bf16.mxu0 %v423
        %438 = vmatpush1.bf16.msra.mxu0 %v420
        %439 = vmatprep.subr.bf16.mxu0 %v385
        %440 = vmatpush1.bf16.msra.mxu0 %v384
        %441 = vmatprep.subr.bf16.mxu0 0
        %442 = vmatpush2.bf16.msra.mxu0 0
        %443 = vmatprep.subr.bf16.mxu0 0
        %444 = vmatpush2.bf16.msra.mxu0 0
        %445 = vmatprep.subr.bf16.mxu0 0
        %446 = vmatpush2.bf16.msra.mxu0 0
        %447 = vmatprep.subr.bf16.mxu0 0
        %448 = vmatpush2.bf16.msra.mxu0 0
        %449 = vmatprep.subr.bf16.mxu0 0
        %450 = vmatpush2.bf16.msra.mxu0 0
        %451 = vmatprep.subr.bf16.mxu0 0
        %452 = vmatpush2.bf16.msra.mxu0 0
        %453 = vmatprep.subr.bf16.mxu0 0
        %454 = vmatpush2.bf16.msra.mxu0 0
        %455 = vmatprep.subr.bf16.mxu0 0
        %456 = vmatpush2.bf16.msra.mxu0 0
        %457 = vmatprep.mubr.bf16.mxu0 0
        %458 = vmatmul.mubr.bf16.gmra.mxu0 %v392
        %v459 = vpop.f32.mrf.mxu0
        %v460 = vadd.f32 %v243, %v459
        %v461 = vpop.f32.mrf.mxu0
        %v462 = vadd.f32 %v243, %v461
        %v463 = vpop.f32.mrf.mxu0
        %v464 = vadd.f32 %v248, %v463
        %v465 = vpop.f32.mrf.mxu0
        %v466 = vadd.f32 %v248, %v465
        %467 = vmatprep.mubr.bf16.mxu0 0
        %468 = vmatmul.mubr.bf16.gmra.mxu0 %v395
        %v469 = vpop.f32.mrf.mxu0
        %v470 = vadd.f32 %v253, %v469
        %v471 = vpop.f32.mrf.mxu0
        %v472 = vadd.f32 %v253, %v471
        %v473 = vpop.f32.mrf.mxu0
        %v474 = vadd.f32 %v258, %v473
        %v475 = vpop.f32.mrf.mxu0
        %v476 = vadd.f32 %v258, %v475
        %477 = vmatprep.mubr.bf16.mxu0 0
        %478 = vmatmul.mubr.bf16.gmra.mxu0 %v398
        %v479 = vpop.f32.mrf.mxu0
        %v480 = vadd.f32 %v263, %v479
        %v481 = vpop.f32.mrf.mxu0
        %v482 = vadd.f32 %v263, %v481
        %v483 = vpop.f32.mrf.mxu0
        %v484 = vadd.f32 %v268, %v483
        %v485 = vpop.f32.mrf.mxu0
        %v486 = vadd.f32 %v268, %v485
        %487 = vmatprep.mubr.bf16.mxu0 0
        %488 = vmatmul.mubr.bf16.gmra.mxu0 %v401
        %v489 = vpop.f32.mrf.mxu0
        %v490 = vadd.f32 %v273, %v489
        %v491 = vpop.f32.mrf.mxu0
        %v492 = vadd.f32 %v273, %v491
        %v493 = vpop.f32.mrf.mxu0
        %v494 = vadd.f32 %v278, %v493
        %v495 = vpop.f32.mrf.mxu0
        %v496 = vadd.f32 %v278, %v495
        %497 = vmatprep.mubr.bf16.mxu0 0
        %498 = vmatmul.mubr.bf16.gmra.mxu0 %v404
        %v499 = vpop.f32.mrf.mxu0
        %v500 = vadd.f32 %v283, %v499
        %v501 = vpop.f32.mrf.mxu0
        %v502 = vadd.f32 %v283, %v501
        %v503 = vpop.f32.mrf.mxu0
        %v504 = vadd.f32 %v288, %v503
        %v505 = vpop.f32.mrf.mxu0
        %v506 = vadd.f32 %v288, %v505
        %507 = vmatprep.mubr.bf16.mxu0 0
        %508 = vmatmul.mubr.bf16.gmra.mxu0 %v407
        %v509 = vpop.f32.mrf.mxu0
        %v510 = vadd.f32 %v293, %v509
        %v511 = vpop.f32.mrf.mxu0
        %v512 = vadd.f32 %v293, %v511
        %v513 = vpop.f32.mrf.mxu0
        %v514 = vadd.f32 %v298, %v513
        %v515 = vpop.f32.mrf.mxu0
        %v516 = vadd.f32 %v298, %v515
        %517 = vmatprep.mubr.bf16.mxu0 0
        %518 = vmatmul.mubr.bf16.gmra.mxu0 %v410
        %v519 = vpop.f32.mrf.mxu0
        %v520 = vadd.f32 %v303, %v519
        %v521 = vpop.f32.mrf.mxu0
        %v522 = vadd.f32 %v303, %v521
        %v523 = vpop.f32.mrf.mxu0
        %v524 = vadd.f32 %v308, %v523
        %v525 = vpop.f32.mrf.mxu0
        %v526 = vadd.f32 %v308, %v525
        %527 = vmatprep.mubr.bf16.mxu0 0
        %528 = vmatmul.mubr.bf16.gmra.mxu0 %v413
        %v529 = vpop.f32.mrf.mxu0
        %v530 = vadd.f32 %v313, %v529
        %v531 = vpop.f32.mrf.mxu0
        %v532 = vadd.f32 %v313, %v531
        %v533 = vpop.f32.mrf.mxu0
        %v534 = vadd.f32 %v318, %v533
        %v535 = vpop.f32.mrf.mxu0
        %v536 = vadd.f32 %v318, %v535
        %537 = vmatprep.mubr.bf16.mxu0 0
        %538 = vmatmul.mubr.bf16.gmra.mxu0 %v416
        %v539 = vpop.f32.mrf.mxu0
        %v540 = vadd.f32 %v323, %v539
        %v541 = vpop.f32.mrf.mxu0
        %v542 = vadd.f32 %v323, %v541
        %v543 = vpop.f32.mrf.mxu0
        %v544 = vadd.f32 %v328, %v543
        %v545 = vpop.f32.mrf.mxu0
        %v546 = vadd.f32 %v328, %v545
        %547 = vdwg.mxu0
        %v548 = vmax.f32 %v460, 0.0
        %v549 = vmax.f32 %v462, 0.0
        %v550 = vmax.f32 %v464, 0.0
        %v551 = vmax.f32 %v466, 0.0
        %v552 = vmax.f32 %v470, 0.0
        %v553 = vmax.f32 %v472, 0.0
        %v554 = vmax.f32 %v474, 0.0
        %v555 = vmax.f32 %v476, 0.0
        %v556 = vmax.f32 %v480, 0.0
        %v557 = vmax.f32 %v482, 0.0
        %v558 = vmax.f32 %v484, 0.0
        %v559 = vmax.f32 %v486, 0.0
        %v560 = vmax.f32 %v490, 0.0
        %v561 = vmax.f32 %v492, 0.0
        %v562 = vmax.f32 %v494, 0.0
        %v563 = vmax.f32 %v496, 0.0
        %v564 = vmax.f32 %v500, 0.0
        %v565 = vmax.f32 %v502, 0.0
        %v566 = vmax.f32 %v504, 0.0
        %v567 = vmax.f32 %v506, 0.0
        %v568 = vmax.f32 %v510, 0.0
        %v569 = vmax.f32 %v512, 0.0
        %v570 = vmax.f32 %v514, 0.0
        %v571 = vmax.f32 %v516, 0.0
        %v572 = vmax.f32 %v520, 0.0
        %v573 = vmax.f32 %v522, 0.0
        %v574 = vmax.f32 %v524, 0.0
        %v575 = vmax.f32 %v526, 0.0
        %v576 = vmax.f32 %v530, 0.0
        %v577 = vmax.f32 %v532, 0.0
        %v578 = vmax.f32 %v534, 0.0
        %v579 = vmax.f32 %v536, 0.0
        %v580 = vmax.f32 %v540, 0.0
        %v581 = vmax.f32 %v542, 0.0
        %v582 = vmax.f32 %v544, 0.0
        %v583 = vmax.f32 %v546, 0.0
        %v584 = vmin.f32 %v548, 6.0
        %v585 = vmin.f32 %v549, 6.0
        %v586 = vmin.f32 %v550, 6.0
        %v587 = vmin.f32 %v551, 6.0
        %v588 = vmin.f32 %v552, 6.0
        %v589 = vmin.f32 %v553, 6.0
        %v590 = vmin.f32 %v554, 6.0
        %v591 = vmin.f32 %v555, 6.0
        %v592 = vmin.f32 %v556, 6.0
        %v593 = vmin.f32 %v557, 6.0
        %v594 = vmin.f32 %v558, 6.0
        %v595 = vmin.f32 %v559, 6.0
        %v596 = vmin.f32 %v560, 6.0
        %v597 = vmin.f32 %v561, 6.0
        %v598 = vmin.f32 %v562, 6.0
        %v599 = vmin.f32 %v563, 6.0
        %v600 = vmin.f32 %v564, 6.0
        %v601 = vmin.f32 %v565, 6.0
        %v602 = vmin.f32 %v566, 6.0
        %v603 = vmin.f32 %v567, 6.0
        %v604 = vmin.f32 %v568, 6.0
        %v605 = vmin.f32 %v569, 6.0
        %v606 = vmin.f32 %v570, 6.0
        %v607 = vmin.f32 %v571, 6.0
        %v608 = vmin.f32 %v572, 6.0
        %v609 = vmin.f32 %v573, 6.0
        %v610 = vmin.f32 %v574, 6.0
        %v611 = vmin.f32 %v575, 6.0
        %v612 = vmin.f32 %v576, 6.0
        %v613 = vmin.f32 %v577, 6.0
        %v614 = vmin.f32 %v578, 6.0
        %v615 = vmin.f32 %v579, 6.0
        %v616 = vmin.f32 %v580, 6.0
        %v617 = vmin.f32 %v581, 6.0
        %v618 = vmin.f32 %v582, 6.0
        %v619 = vmin.f32 %v583, 6.0
        %620 = vst [vmem:[%s188] sm:$0xff] %v584
        %621 = vst [vmem:[%s188 + $0x8] sm:$0xff] %v585
        %622 = vst [vmem:[%s188 + $0x10] sm:$0xff] %v586
        %623 = vst [vmem:[%s188 + $0x18] sm:$0xff] %v587
        %624 = vst [vmem:[%s188 + $0x20] sm:$0xff] %v588
        %625 = vst [vmem:[%s188 + $0x28] sm:$0xff] %v589
        %626 = vst [vmem:[%s188 + $0x30] sm:$0xff] %v590
        %627 = vst [vmem:[%s188 + $0x38] sm:$0xff] %v591
        %628 = vst [vmem:[%s188 + $0x40] sm:$0xff] %v592
        %629 = vst [vmem:[%s188 + $0x48] sm:$0xff] %v593
        %630 = vst [vmem:[%s188 + $0x50] sm:$0xff] %v594
        %631 = vst [vmem:[%s188 + $0x58] sm:$0xff] %v595
        %632 = vst [vmem:[%s188 + $0x60] sm:$0xff] %v596
        %633 = vst [vmem:[%s188 + $0x68] sm:$0xff] %v597
        %634 = vst [vmem:[%s188 + $0x70] sm:$0xff] %v598
        %635 = vst [vmem:[%s188 + $0x78] sm:$0xff] %v599
        %636 = vst [vmem:[%s188 + $0x80] sm:$0xff] %v600
        %637 = vst [vmem:[%s188 + $0x88] sm:$0xff] %v601
        %638 = vst [vmem:[%s188 + $0x90] sm:$0xff] %v602
        %639 = vst [vmem:[%s188 + $0x98] sm:$0xff] %v603
        %640 = vst [vmem:[%s188 + $0xa0] sm:$0xff] %v604
        %641 = vst [vmem:[%s188 + $0xa8] sm:$0xff] %v605
        %642 = vst [vmem:[%s188 + $0xb0] sm:$0xff] %v606
        %643 = vst [vmem:[%s188 + $0xb8] sm:$0xff] %v607
        %644 = vst [vmem:[%s188 + $0xc0] sm:$0xff] %v608
        %645 = vst [vmem:[%s188 + $0xc8] sm:$0xff] %v609
        %646 = vst [vmem:[%s188 + $0xd0] sm:$0xff] %v610
        %647 = vst [vmem:[%s188 + $0xd8] sm:$0xff] %v611
        %648 = vst [vmem:[%s188 + $0xe0] sm:$0xff] %v612
        %649 = vst [vmem:[%s188 + $0xe8] sm:$0xff] %v613
        %650 = vst [vmem:[%s188 + $0xf0] sm:$0xff] %v614
        %651 = vst [vmem:[%s188 + $0xf8] sm:$0xff] %v615
        %652 = vst [vmem:[%s188 + $0x100] sm:$0xff] %v616
        %653 = vst [vmem:[%s188 + $0x108] sm:$0xff] %v617
        %654 = vst [vmem:[%s188 + $0x110] sm:$0xff] %v618
        %655 = vst [vmem:[%s188 + $0x118] sm:$0xff] %v619
        %s656 = sand.u32 %s109, 1
        %s657 = scalar_lea.sflag [#allocation3], %s656
        %s658 = sand.u32 %s109, 1
        %s659 = smul.addr %s658, 288
        %s660 = scalar_lea.vmem [#allocation2], %s659
        // Predicated region
        $region33: #{tpu_custom_call.1} parent=31 // pred_check
          %p661 = pneg %p119
        $region34: #{tpu_custom_call.1} parent=31 // pred_check_branch
          %663 = sbr.rel (%p661) target = $region36
        $region35: #{tpu_custom_call.1} parent=31 // pred_region
          %s664 = smul.u32 2, %s22
          %s666 = ssub.s32 4608, 4608
          %667 = vsyncadd %s657, %s666
          %s668 = smul.addr %s21, 36
          %s669 = sadd.s32 %s664, %s668
          %s670 = smul.addr %s669, 128
          %s671 = scalar_lea.hbm %s3, %s670
          %s672 = sshll.u32 %s660, 4
          %s673 = int_to_ptr.vmem [resolvable:$true] %s672
          %678 = dma.vmem_to_hbm [thread:$0]  %s673, 4608, %s671, %s657, 256, 256, 16
        $region36: #{tpu_custom_call.1} parent=31 // pred_fallthru
          _
      $region32: #{tpu_custom_call.1} parent=5 // pred_fallthru
        _
      %p679 = scmp.le.s32.totalorder 2, %s12
      // Predicated region
      $region37: #{tpu_custom_call.1} parent=5 // pred_check
        %p680 = pneg %p679
      $region38: #{tpu_custom_call.1} parent=5 // pred_check_branch
        %682 = sbr.rel (%p680) target = $region40
      $region39: #{tpu_custom_call.1} parent=5 // pred_region
        %s683 = ssub.s32 %s12, 2
        // Predicated region
        $region41: #{tpu_custom_call.1} parent=39 // pred_check
          %p684 = pneg %p125
        $region42: #{tpu_custom_call.1} parent=39 // pred_check_branch
          %686 = sbr.rel (%p684) target = $region44
        $region43: #{tpu_custom_call.1} parent=39 // pred_region
          %s687 = sand.u32 %s110, 1
          %s688 = scalar_lea.sflag [#allocation3], %s687
          %s689 = sand.u32 %s110, 1
          %s690 = smul.addr %s689, 288
          %s691 = scalar_lea.vmem [#allocation2], %s690
          %692 = dma.done %s688, 4608
        $region44: #{tpu_custom_call.1} parent=39 // pred_fallthru
          _
      $region40: #{tpu_custom_call.1} parent=5 // pred_fallthru
        _
    $region6: #{tpu_custom_call.1} parent=1 // loop_footer
      %s16 = sadd.s32 1, %s12
    $region7: #{tpu_custom_call.1} parent=1 // loop_footer_branch
      %11 = sbr.rel target = $region3
    $region8: #{tpu_custom_call.1} parent=1 // loop_exit
      _
    %693 = vsyncpa [#allocation3], 1
    %s694 = scalar_lea.sflag [#allocation3], 1
    %695 = vsyncpa %s694, 1

</llo_original>
